<compile_context>
chip_gen: v5e
topology: v5e:2x2
jax: 0.10.0
libtpu: 0.0.40
codegen_flags: <defaults>
</compile_context>

<pallas_src>
import functools

import jax
import jax.numpy as jnp
from jax.experimental import pallas as pl
from jax.experimental.pallas import tpu as pltpu


def _dice_kernel(pred_ref, targ_ref, out_ref, inter_acc, sq_acc, *,
                 eps: float, num_channels: int, num_col_blocks: int,
                 block_cols: int, total_cols: int, steps_per_split: int):
    p_id = pl.program_id(0)           # core-split index
    k = pl.program_id(1)              # column-block step within this split
    g = p_id * steps_per_split + k    # global column-block index

    r = pred_ref.shape[0]

    @pl.when(k == 0)
    def _init():
        inter_acc[...] = jnp.zeros_like(inter_acc)
        sq_acc[...] = jnp.zeros_like(sq_acc)

    zeros = jnp.zeros((r, 128), jnp.float32)

    def accumulate_chunks(nchunks, inter0, sq0):
        # vreg-resident carry; accumulators hit VMEM only once per grid step.
        if nchunks == 0:
            return inter0, sq0

        def body(j, carry):
            inter, sq = carry
            off = pl.multiple_of(j * 128, 128)
            p = pred_ref[:, pl.ds(off, 128)].astype(jnp.float32)
            t = targ_ref[:, pl.ds(off, 128)].astype(jnp.float32)
            return inter + p * t, sq + p * p + t * t

        return jax.lax.fori_loop(0, nchunks, body, (inter0, sq0),
                                 unroll=min(8, nchunks))

    nchunks_full = block_cols // 128
    tail_cols = total_cols - (num_col_blocks - 1) * block_cols   # in (0, block_cols]
    tail_full = tail_cols // 128
    tail_rem = tail_cols % 128

    if tail_cols == block_cols:
        # M is an exact multiple of the block width: every valid block is full.
        @pl.when(g < num_col_blocks)
        def _all_full():
            inter, sq = accumulate_chunks(nchunks_full, zeros, zeros)
            inter_acc[...] += inter
            sq_acc[...] += sq
    else:
        if num_col_blocks > 1:
            @pl.when(g < num_col_blocks - 1)
            def _full():
                inter, sq = accumulate_chunks(nchunks_full, zeros, zeros)
                inter_acc[...] += inter
                sq_acc[...] += sq

        @pl.when(g == num_col_blocks - 1)
        def _tail():
            inter, sq = accumulate_chunks(tail_full, zeros, zeros)
            if tail_rem > 0:
                lane = jax.lax.broadcasted_iota(jnp.int32, (r, 128), 1)
                mask = lane < tail_rem
                off = tail_full * 128
                # Out-of-range lanes hold DMA garbage: force exact zeros first.
                p = jnp.where(mask, pred_ref[:, pl.ds(off, 128)].astype(jnp.float32), 0.0)
                t = jnp.where(mask, targ_ref[:, pl.ds(off, 128)].astype(jnp.float32), 0.0)
                inter = inter + p * t
                sq = sq + p * p + t * t
            inter_acc[...] += inter
            sq_acc[...] += sq

    # Steps with g >= num_col_blocks (grid padding from the core split) skip
    # accumulation entirely; their clamped input blocks are simply ignored.

    @pl.when(k == pl.num_programs(1) - 1)
    def _finalize():
        # Single cross-lane reduction per accumulator (XLU, once per split).
        inter_r = jnp.sum(inter_acc[...], axis=1, keepdims=True)   # (R, 1)
        sq_r = jnp.sum(sq_acc[...], axis=1, keepdims=True)         # (R, 1)

        # Row rho of the (N*C, M) slab belongs to channel rho % C: fold batch
        # rows per channel with a static one-hot selector.
        c_lanes = out_ref.shape[2]
        row_idx = jax.lax.broadcasted_iota(jnp.int32, (r, c_lanes), 0)
        col_idx = jax.lax.broadcasted_iota(jnp.int32, (r, c_lanes), 1)
        sel = jnp.where((col_idx < num_channels) &
                        (row_idx % num_channels == col_idx), 1.0, 0.0)

        inter_c = jnp.sum(sel * inter_r, axis=0, keepdims=True)    # (1, c_lanes)
        denom_c = jnp.sum(sel * sq_r, axis=0, keepdims=True)       # (1, c_lanes)
        out_ref[0] = jnp.concatenate([inter_c, denom_c], axis=0)   # (2, c_lanes)


def dice_coefficient_loss(pred, target, eps=1e-6,
                          max_block_bytes=8 * 1024 * 1024,
                          num_core_splits=2):
    """Pallas equivalent of DiceCoefficientLoss.forward (returns a scalar)."""
    assert pred.shape == target.shape
    n, c = pred.shape[0], pred.shape[1]
    m = 1
    for s in pred.shape[2:]:
        m *= s
    r = n * c

    # Free row-major reshape, native dtype: (N, C, *spatial) -> (N*C, M).
    p2d = pred.reshape(r, m)
    t2d = target.reshape(r, m)

    itemsize = max(jnp.dtype(pred.dtype).itemsize,
                   jnp.dtype(target.dtype).itemsize)

    # Widest multiple-of-128 tile whose per-input block fits max_block_bytes,
    # then re-balance so the padded columns are bounded by <128 per block.
    tn_budget = max(128, (max_block_bytes // (r * itemsize)) // 128 * 128)
    num_col_blocks = pl.cdiv(m, tn_budget)
    tn = pl.cdiv(pl.cdiv(m, num_col_blocks), 128) * 128

    # Split the column-block range across TensorCores (helps on v7x's 2 TCs;
    # harmless sequential split on v5e/v6e).
    splits = num_core_splits if num_col_blocks >= num_core_splits else 1
    steps_per_split = pl.cdiv(num_col_blocks, splits)

    c_lanes = max(128, pl.cdiv(c, 128) * 128)

    kernel = functools.partial(
        _dice_kernel, eps=float(eps), num_channels=c,
        num_col_blocks=num_col_blocks, block_cols=tn, total_cols=m,
        steps_per_split=steps_per_split)

    def in_map(p, k):
        # Clamp grid-padding steps (g >= num_col_blocks) to a valid block; the
        # kernel skips their accumulation.
        return (0, jnp.minimum(p * steps_per_split + k, num_col_blocks - 1))

    # VMEM budget: 2 inputs x 2 pipeline buffers + 2 f32 accumulators + margin,
    # capped below v7x's 64 MiB physical per-TC VMEM.
    block_bytes = r * tn * itemsize
    acc_bytes = 2 * r * 128 * 4
    vmem_limit = min(max(4 * block_bytes + acc_bytes + (8 << 20), 32 << 20),
                     56 << 20)

    partials = pl.pallas_call(
        kernel,
        out_shape=jax.ShapeDtypeStruct((splits, 2, c_lanes), jnp.float32),
        grid_spec=pltpu.PrefetchScalarGridSpec(
            num_scalar_prefetch=0,
            grid=(splits, steps_per_split),
            in_specs=[
                pl.BlockSpec((r, tn), in_map),
                pl.BlockSpec((r, tn), in_map),
            ],
            out_specs=pl.BlockSpec((1, 2, c_lanes), lambda p, k: (p, 0, 0)),
            scratch_shapes=[
                pltpu.VMEM((r, 128), jnp.float32),   # sum(pred * target)
                pltpu.VMEM((r, 128), jnp.float32),   # sum(pred^2 + target^2)
            ],
        ),
        compiler_params=pltpu.CompilerParams(
            dimension_semantics=("parallel", "arbitrary"),
            vmem_limit_bytes=int(vmem_limit)),
    )(p2d, t2d)

    # Tiny cross-split combine + final dice math (2*C values).
    inter_c = jnp.sum(partials[:, 0, :c], axis=0)
    denom_c = jnp.sum(partials[:, 1, :c], axis=0)
    dice_c = 1.0 - 2.0 * inter_c / jnp.maximum(denom_c, eps)
    return jnp.sum(dice_c) / c


def dice_coefficient_loss_ref(pred, target, eps=1e-6):
    """Pure-JAX reference matching the PyTorch forward."""
    c = pred.shape[1]
    loss = 0.0
    for ch in range(c):
        p = pred[:, ch, ...].astype(jnp.float32)
        t = target[:, ch, ...].astype(jnp.float32)
        inter = jnp.sum(p * t)
        denom = jnp.sum(p * p) + jnp.sum(t * t)
        loss += 1.0 - 2.0 * inter / jnp.maximum(denom, eps)
    return loss / c


if __name__ == "__main__":
    key = jax.random.PRNGKey(0)
    k1, k2 = jax.random.split(key)

    # Small 3D-CNN-style shape: N=2, C=4, D=H=W=8 (NCDHW).
    shape = (2, 4, 8, 8, 8)
    pred = jax.nn.sigmoid(jax.random.normal(k1, shape, dtype=jnp.float32))
    target = (jax.random.uniform(k2, shape) > 0.5).astype(jnp.float32)

    loss = jax.block_until_ready(dice_coefficient_loss(pred, target))
    ref = jax.block_until_ready(dice_coefficient_loss_ref(pred, target))
    assert jnp.allclose(loss, ref, rtol=1e-5, atol=1e-6), (loss, ref)

    # Extra check: ragged M tail, multi-block grid, 2-way core split.
    shape2 = (2, 4, 8, 9, 9)   # M = 648 -> 6 column blocks of 128, tail of 8
    p2 = jax.nn.sigmoid(jax.random.normal(k1, shape2, dtype=jnp.float32))
    t2 = (jax.random.uniform(k2, shape2) > 0.5).astype(jnp.float32)
    loss2 = jax.block_until_ready(
        dice_coefficient_loss(p2, t2, max_block_bytes=128 * 8 * 4))
    ref2 = jax.block_until_ready(dice_coefficient_loss_ref(p2, t2))
    assert jnp.allclose(loss2, ref2, rtol=1e-5, atol=1e-6), (loss2, ref2)

    # Extra check: odd block count -> clamped index map / skipped padding step.
    shape3 = (2, 4, 8, 8, 9)   # M = 576 -> 5 column blocks, split as 2 x 3
    p3 = jax.nn.sigmoid(jax.random.normal(k1, shape3, dtype=jnp.float32))
    t3 = (jax.random.uniform(k2, shape3) > 0.5).astype(jnp.float32)
    loss3 = jax.block_until_ready(
        dice_coefficient_loss(p3, t3, max_block_bytes=128 * 8 * 4))
    ref3 = jax.block_until_ready(dice_coefficient_loss_ref(p3, t3))
    assert jnp.allclose(loss3, ref3, rtol=1e-5, atol=1e-6), (loss3, ref3)

    print("KERNEL_OK")
</pallas_src>

<mosaic_0001>
module attributes {stable_mosaic.version = 11 : i64} {
  func.func @_dice_kernel(%arg0: i32, %arg1: i32, %arg2: memref<8x512xf32, #tpu.memory_space<vmem>>, %arg3: memref<8x512xf32, #tpu.memory_space<vmem>>, %arg4: memref<1x2x128xf32, #tpu.memory_space<vmem>>, %arg5: memref<8x128xf32, #tpu.memory_space<vmem>>, %arg6: memref<8x128xf32, #tpu.memory_space<vmem>>) attributes {dimension_semantics = [#tpu.dimension_semantics<parallel>, #tpu.dimension_semantics<arbitrary>], iteration_bounds = array<i64: 1, 1>, scalar_prefetch = 0 : i64, scratch_operands = 2 : i64, tpu.core_type = #tpu.core_type<tc>, window_params = [{transform_indices = @transform_0, window_bounds = array<i64: 8, 512>}, {transform_indices = @transform_1, window_bounds = array<i64: 8, 512>}, {transform_indices = @transform_2, window_bounds = array<i64: 1, 2, 128>}]} {
    %c1_i32 = arith.constant 1 : i32
    %0 = arith.muli %arg0, %c1_i32 : i32
    %1 = arith.addi %0, %arg1 : i32
    %c0_i32 = arith.constant 0 : i32
    %2 = arith.cmpi eq, %arg1, %c0_i32 : i32
    %3 = arith.extui %2 : i1 to i32
    %c0_i32_0 = arith.constant 0 : i32
    %4 = arith.cmpi ne, %3, %c0_i32_0 : i32
    scf.if %4 {
      %cst_5 = arith.constant 0.000000e+00 : f32
      %12 = vector.broadcast %cst_5 : f32 to vector<8x128xf32>
      %c0 = arith.constant 0 : index
      %c0_6 = arith.constant 0 : index
      %13 = vector.load %arg5[%c0, %c0_6] : memref<8x128xf32, #tpu.memory_space<vmem>>, vector<8x128xf32>
      tpu.vector_store %arg5[%c0, %c0_6], %12 {strides = array<i32>} : memref<8x128xf32, #tpu.memory_space<vmem>>, vector<8x128xf32>,
      %cst_7 = arith.constant 0.000000e+00 : f32
      %14 = vector.broadcast %cst_7 : f32 to vector<8x128xf32>
      %c0_8 = arith.constant 0 : index
      %c0_9 = arith.constant 0 : index
      %15 = vector.load %arg6[%c0_8, %c0_9] : memref<8x128xf32, #tpu.memory_space<vmem>>, vector<8x128xf32>
      tpu.vector_store %arg6[%c0_8, %c0_9], %14 {strides = array<i32>} : memref<8x128xf32, #tpu.memory_space<vmem>>, vector<8x128xf32>,
    } else {
    }
    %cst = arith.constant 0.000000e+00 : f32
    %5 = vector.broadcast %cst : f32 to vector<8x128xf32>
    %c1_i32_1 = arith.constant 1 : i32
    %6 = arith.cmpi slt, %1, %c1_i32_1 : i32
    %7 = arith.extui %6 : i1 to i32
    %c0_i32_2 = arith.constant 0 : i32
    %8 = arith.cmpi ne, %7, %c0_i32_2 : i32
    scf.if %8 {
      %c0_i32_5 = arith.constant 0 : i32
      %c128_i32 = arith.constant 128 : i32
      %12 = arith.muli %c0_i32_5, %c128_i32 : i32
      %13 = tpu.assume_multiple %12, 128 : i32
      %c0 = arith.constant 0 : index
      %14 = arith.index_cast %13 : i32 to index
      %15 = vector.load %arg2[%c0, %14] : memref<8x512xf32, #tpu.memory_space<vmem>>, vector<8x128xf32>
      %c0_6 = arith.constant 0 : index
      %16 = arith.index_cast %13 : i32 to index
      %17 = vector.load %arg3[%c0_6, %16] : memref<8x512xf32, #tpu.memory_space<vmem>>, vector<8x128xf32>
      %18 = arith.mulf %15, %17 : vector<8x128xf32>
      %19 = arith.addf %5, %18 : vector<8x128xf32>
      %20 = arith.mulf %15, %15 : vector<8x128xf32>
      %21 = arith.addf %5, %20 : vector<8x128xf32>
      %22 = arith.mulf %17, %17 : vector<8x128xf32>
      %23 = arith.addf %21, %22 : vector<8x128xf32>
      %c1_i32_7 = arith.constant 1 : i32
      %c128_i32_8 = arith.constant 128 : i32
      %24 = arith.muli %c1_i32_7, %c128_i32_8 : i32
      %25 = tpu.assume_multiple %24, 128 : i32
      %c0_9 = arith.constant 0 : index
      %26 = arith.index_cast %25 : i32 to index
      %27 = vector.load %arg2[%c0_9, %26] : memref<8x512xf32, #tpu.memory_space<vmem>>, vector<8x128xf32>
      %c0_10 = arith.constant 0 : index
      %28 = arith.index_cast %25 : i32 to index
      %29 = vector.load %arg3[%c0_10, %28] : memref<8x512xf32, #tpu.memory_space<vmem>>, vector<8x128xf32>
      %30 = arith.mulf %27, %29 : vector<8x128xf32>
      %31 = arith.addf %19, %30 : vector<8x128xf32>
      %32 = arith.mulf %27, %27 : vector<8x128xf32>
      %33 = arith.addf %23, %32 : vector<8x128xf32>
      %34 = arith.mulf %29, %29 : vector<8x128xf32>
      %35 = arith.addf %33, %34 : vector<8x128xf32>
      %c2_i32 = arith.constant 2 : i32
      %c128_i32_11 = arith.constant 128 : i32
      %36 = arith.muli %c2_i32, %c128_i32_11 : i32
      %37 = tpu.assume_multiple %36, 128 : i32
      %c0_12 = arith.constant 0 : index
      %38 = arith.index_cast %37 : i32 to index
      %39 = vector.load %arg2[%c0_12, %38] : memref<8x512xf32, #tpu.memory_space<vmem>>, vector<8x128xf32>
      %c0_13 = arith.constant 0 : index
      %40 = arith.index_cast %37 : i32 to index
      %41 = vector.load %arg3[%c0_13, %40] : memref<8x512xf32, #tpu.memory_space<vmem>>, vector<8x128xf32>
      %42 = arith.mulf %39, %41 : vector<8x128xf32>
      %43 = arith.addf %31, %42 : vector<8x128xf32>
      %44 = arith.mulf %39, %39 : vector<8x128xf32>
      %45 = arith.addf %35, %44 : vector<8x128xf32>
      %46 = arith.mulf %41, %41 : vector<8x128xf32>
      %47 = arith.addf %45, %46 : vector<8x128xf32>
      %c3_i32 = arith.constant 3 : i32
      %c128_i32_14 = arith.constant 128 : i32
      %48 = arith.muli %c3_i32, %c128_i32_14 : i32
      %49 = tpu.assume_multiple %48, 128 : i32
      %c0_15 = arith.constant 0 : index
      %50 = arith.index_cast %49 : i32 to index
      %51 = vector.load %arg2[%c0_15, %50] : memref<8x512xf32, #tpu.memory_space<vmem>>, vector<8x128xf32>
      %c0_16 = arith.constant 0 : index
      %52 = arith.index_cast %49 : i32 to index
      %53 = vector.load %arg3[%c0_16, %52] : memref<8x512xf32, #tpu.memory_space<vmem>>, vector<8x128xf32>
      %54 = arith.mulf %51, %53 : vector<8x128xf32>
      %55 = arith.addf %43, %54 : vector<8x128xf32>
      %56 = arith.mulf %51, %51 : vector<8x128xf32>
      %57 = arith.addf %47, %56 : vector<8x128xf32>
      %58 = arith.mulf %53, %53 : vector<8x128xf32>
      %59 = arith.addf %57, %58 : vector<8x128xf32>
      %c4_i32 = arith.constant 4 : i32
      %c0_17 = arith.constant 0 : index
      %c0_18 = arith.constant 0 : index
      %60 = vector.load %arg5[%c0_17, %c0_18] : memref<8x128xf32, #tpu.memory_space<vmem>>, vector<8x128xf32>
      %61 = arith.addf %60, %55 : vector<8x128xf32>
      %c0_19 = arith.constant 0 : index
      %c0_20 = arith.constant 0 : index
      %62 = vector.load %arg5[%c0_19, %c0_20] : memref<8x128xf32, #tpu.memory_space<vmem>>, vector<8x128xf32>
      tpu.vector_store %arg5[%c0_19, %c0_20], %61 {strides = array<i32>} : memref<8x128xf32, #tpu.memory_space<vmem>>, vector<8x128xf32>,
      %c0_21 = arith.constant 0 : index
      %c0_22 = arith.constant 0 : index
      %63 = vector.load %arg6[%c0_21, %c0_22] : memref<8x128xf32, #tpu.memory_space<vmem>>, vector<8x128xf32>
      %64 = arith.addf %63, %59 : vector<8x128xf32>
      %c0_23 = arith.constant 0 : index
      %c0_24 = arith.constant 0 : index
      %65 = vector.load %arg6[%c0_23, %c0_24] : memref<8x128xf32, #tpu.memory_space<vmem>>, vector<8x128xf32>
      tpu.vector_store %arg6[%c0_23, %c0_24], %64 {strides = array<i32>} : memref<8x128xf32, #tpu.memory_space<vmem>>, vector<8x128xf32>,
    } else {
    }
    %c0_i32_3 = arith.constant 0 : i32
    %9 = arith.cmpi eq, %arg1, %c0_i32_3 : i32
    %10 = arith.extui %9 : i1 to i32
    %c0_i32_4 = arith.constant 0 : i32
    %11 = arith.cmpi ne, %10, %c0_i32_4 : i32
    scf.if %11 {
      %c0 = arith.constant 0 : index
      %c0_5 = arith.constant 0 : index
      %12 = vector.load %arg5[%c0, %c0_5] : memref<8x128xf32, #tpu.memory_space<vmem>>, vector<8x128xf32>
      %cst_6 = arith.constant dense<0.000000e+00> : vector<8xf32>
      %13 = vector.multi_reduction <add>, %12, %cst_6 [1] : vector<8x128xf32> to vector<8xf32>
      %14 = vector.shape_cast %13 : vector<8xf32> to vector<8x1xf32>
      %c0_7 = arith.constant 0 : index
      %c0_8 = arith.constant 0 : index
      %15 = vector.load %arg6[%c0_7, %c0_8] : memref<8x128xf32, #tpu.memory_space<vmem>>, vector<8x128xf32>
      %cst_9 = arith.constant dense<0.000000e+00> : vector<8xf32>
      %16 = vector.multi_reduction <add>, %15, %cst_9 [1] : vector<8x128xf32> to vector<8xf32>
      %17 = vector.shape_cast %16 : vector<8xf32> to vector<8x1xf32>
      %18 = tpu.iota {dimensions = array<i32: 0>} : vector<8x128xi32>
      %19 = tpu.iota {dimensions = array<i32: 1>} : vector<8x128xi32>
      %c4_i32 = arith.constant 4 : i32
      %20 = vector.broadcast %c4_i32 : i32 to vector<8x128xi32>
      %21 = arith.cmpi slt, %19, %20 : vector<8x128xi32>
      %c4_i32_10 = arith.constant 4 : i32
      %c0_i32_11 = arith.constant 0 : i32
      %22 = arith.cmpi eq, %c4_i32_10, %c0_i32_11 : i32
      %c1_i32_12 = arith.constant 1 : i32
      %23 = arith.select %22, %c1_i32_12, %c4_i32_10 : i32
      %24 = vector.broadcast %23 : i32 to vector<8x128xi32>
      %25 = arith.remsi %18, %24 : vector<8x128xi32>
      %c0_i32_13 = arith.constant 0 : i32
      %26 = vector.broadcast %c0_i32_13 : i32 to vector<8x128xi32>
      %27 = arith.cmpi ne, %25, %26 : vector<8x128xi32>
      %c0_i32_14 = arith.constant 0 : i32
      %28 = vector.broadcast %c0_i32_14 : i32 to vector<8x128xi32>
      %29 = arith.cmpi slt, %25, %28 : vector<8x128xi32>
      %c0_i32_15 = arith.constant 0 : i32
      %30 = arith.cmpi slt, %23, %c0_i32_15 : i32
      %31 = vector.broadcast %30 : i1 to vector<8x128xi1>
      %32 = vector.broadcast %31 : vector<8x128xi1> to vector<8x128xi1>
      %33 = arith.xori %29, %32 : vector<8x128xi1>
      %34 = arith.andi %33, %27 : vector<8x128xi1>
      %35 = vector.broadcast %23 : i32 to vector<8x128xi32>
      %36 = arith.addi %25, %35 : vector<8x128xi32>
      %37 = arith.select %34, %36, %25 : vector<8x128xi1>, vector<8x128xi32>
      %38 = arith.cmpi eq, %37, %19 : vector<8x128xi32>
      %39 = arith.andi %21, %38 : vector<8x128xi1>
      %cst_16 = arith.constant 1.000000e+00 : f32
      %cst_17 = arith.constant 0.000000e+00 : f32
      %40 = vector.broadcast %cst_16 : f32 to vector<8x128xf32>
      %41 = vector.broadcast %cst_17 : f32 to vector<8x128xf32>
      %42 = arith.select %39, %40, %41 : vector<8x128xi1>, vector<8x128xf32>
      %43 = vector.broadcast %14 : vector<8x1xf32> to vector<8x128xf32>
      %44 = arith.mulf %42, %43 : vector<8x128xf32>
      %cst_18 = arith.constant dense<0.000000e+00> : vector<128xf32>
      %45 = vector.multi_reduction <add>, %44, %cst_18 [0] : vector<8x128xf32> to vector<128xf32>
      %46 = vector.shape_cast %45 : vector<128xf32> to vector<1x128xf32>
      %47 = vector.broadcast %17 : vector<8x1xf32> to vector<8x128xf32>
      %48 = arith.mulf %42, %47 : vector<8x128xf32>
      %cst_19 = arith.constant dense<0.000000e+00> : vector<128xf32>
      %49 = vector.multi_reduction <add>, %48, %cst_19 [0] : vector<8x128xf32> to vector<128xf32>
      %50 = vector.shape_cast %49 : vector<128xf32> to vector<1x128xf32>
      %51 = tpu.concatenate %46, %50 in 0 : vector<1x128xf32>, vector<1x128xf32> -> vector<2x128xf32>
      %c0_20 = arith.constant 0 : index
      %c0_21 = arith.constant 0 : index
      %c0_22 = arith.constant 0 : index
      %52 = vector.load %arg4[%c0_20, %c0_21, %c0_22] : memref<1x2x128xf32, #tpu.memory_space<vmem>>, vector<1x2x128xf32>
      %53 = vector.shape_cast %52 : vector<1x2x128xf32> to vector<2x128xf32>
      %54 = vector.shape_cast %51 : vector<2x128xf32> to vector<1x2x128xf32>
      tpu.vector_store %arg4[%c0_20, %c0_21, %c0_22], %54 {strides = array<i32>} : memref<1x2x128xf32, #tpu.memory_space<vmem>>, vector<1x2x128xf32>,
    } else {
    }
    return
  }
  func.func @transform_0(%arg0: i32, %arg1: i32) -> (i32, i32) {
    %c1_i32 = arith.constant 1 : i32
    %0 = arith.muli %arg0, %c1_i32 : i32
    %1 = arith.addi %0, %arg1 : i32
    %c0_i32 = arith.constant 0 : i32
    %2 = arith.minsi %1, %c0_i32 : i32
    %c0_i32_0 = arith.constant 0 : i32
    %c0_i32_1 = arith.constant 0 : i32
    return %c0_i32_0, %2 : i32, i32
  }
  func.func @transform_1(%arg0: i32, %arg1: i32) -> (i32, i32) {
    %c1_i32 = arith.constant 1 : i32
    %0 = arith.muli %arg0, %c1_i32 : i32
    %1 = arith.addi %0, %arg1 : i32
    %c0_i32 = arith.constant 0 : i32
    %2 = arith.minsi %1, %c0_i32 : i32
    %c0_i32_0 = arith.constant 0 : i32
    %c0_i32_1 = arith.constant 0 : i32
    return %c0_i32_0, %2 : i32, i32
  }
  func.func @transform_2(%arg0: i32, %arg1: i32) -> (i32, i32, i32) {
    %c0_i32 = arith.constant 0 : i32
    %c0_i32_0 = arith.constant 0 : i32
    %c0_i32_1 = arith.constant 0 : i32
    return %arg0, %c0_i32, %c0_i32_0 : i32, i32, i32
  }
}

</mosaic_0001>

<llo_original>
// kernel: tpu_custom_call.1
$region0: #{tpu_custom_call.1}
  #allocation0 [shape = 'u32[]', space=smem, size = 0x4, offset = 0x4, fixed_abs, tag = 'smem constant byte address 0x4 - core index']
  #allocation1 [shape = 'u32[72,128]{1,0:T(1,128)}', space=vmem, size = 0x9000, scoped, tag = 'internal scratch']
  #allocation2 [shape = 'f32[8,128]{1,0:T(8,128)}', space=vmem, size = 0x1000, scoped, tag = 'scratch operand']
  #allocation3 [shape = 'f32[8,128]{1,0:T(8,128)}', space=vmem, size = 0x1000, scoped, tag = 'scratch operand']
  %s0 = inlined_call_operand.hbm [shape: f32[8,512], index: 0, kind: input, shape index: {}]
  %s1 = inlined_call_operand.hbm [shape: f32[8,512], index: 1, kind: input, shape index: {}]
  %s2 = inlined_call_operand.hbm [shape: f32[1,2,128], index: 2, kind: output, shape index: {}]
  %s3 = sld [smem:[#allocation0]]
  $region38: #{tpu_custom_call.1} parent=0
    _
  %s5 = ssub.s32 1, %s3
  %s6 = scalar_select 0, %s5, %s3
  $region1: #{tpu_custom_call.1} parent=0
    #allocation4 [shape = 'u8[16384]{0}', space=vmem, size = 0x4000, scoped, tag = 'input window, operand 0, single buffered']
    #allocation5 [shape = 's32[1]{0}', space=sflag, size = 0x4, scoped, tag = 'scoped memory for tpu_custom_call.1']
    #allocation6 [shape = 's32[1]{0}', space=sflag, size = 0x4, scoped, tag = 'scoped memory for tpu_custom_call.1']
    #allocation7 [shape = 'u8[16384]{0}', space=vmem, size = 0x4000, scoped, tag = 'input window, operand 1, single buffered']
    #allocation8 [shape = 's32[1]{0}', space=sflag, size = 0x4, scoped, tag = 'scoped memory for tpu_custom_call.1']
    #allocation9 [shape = 'u8[1024]{0}', space=vmem, size = 0x400, scoped, tag = 'output window, operand 0, single buffered']
    %7 = vsyncpa [#allocation5], 0
    %8 = vsyncpa [#allocation8], 0
    %9 = vsyncpa [#allocation6], 0
    // Predicated region
    $region2: #{tpu_custom_call.1} parent=1 // pred_check
      _
    $region3: #{tpu_custom_call.1} parent=1 // pred_check_branch
      %11 = sbr.rel (0) target = $region5
    $region4: #{tpu_custom_call.1} parent=1 // pred_region
      %s12 = sadd.s32 0, 0
      %p13 = scmp.lt.s32.totalorder %s12, 0
      %s14 = scalar_select %p13, %s12, 0
      %s15 = smul.u32 4, %s14
      %17 = vsyncadd [#allocation5], 0
      %s18 = smul.addr %s15, 8
      %s19 = scalar_lea.hbm %s0, %s18
      %s21 = sshll.u32 %s19, 4
      %s22 = int_to_ptr.hbm [resolvable:$true] %s21
      %s23 = sshll.u32 [#allocation4], 4
      %s24 = int_to_ptr.vmem [resolvable:$true] %s23
      %26 = dma.hbm_to_vmem [thread:$0]  %s22, 512, %s24, [#allocation5]
    $region5: #{tpu_custom_call.1} parent=1 // pred_fallthru
      _
    // Predicated region
    $region6: #{tpu_custom_call.1} parent=1 // pred_check
      _
    $region7: #{tpu_custom_call.1} parent=1 // pred_check_branch
      %28 = sbr.rel (0) target = $region9
    $region8: #{tpu_custom_call.1} parent=1 // pred_region
      %s29 = sadd.s32 0, 0
      %p30 = scmp.lt.s32.totalorder %s29, 0
      %s31 = scalar_select %p30, %s29, 0
      %s32 = smul.u32 4, %s31
      %34 = vsyncadd [#allocation8], 0
      %s35 = smul.addr %s32, 8
      %s36 = scalar_lea.hbm %s1, %s35
      %s38 = sshll.u32 %s36, 4
      %s39 = int_to_ptr.hbm [resolvable:$true] %s38
      %s40 = sshll.u32 [#allocation7], 4
      %s41 = int_to_ptr.vmem [resolvable:$true] %s40
      %43 = dma.hbm_to_vmem [thread:$0]  %s39, 512, %s41, [#allocation8]
    $region9: #{tpu_custom_call.1} parent=1 // pred_fallthru
      _
    // Predicated region
    $region10: #{tpu_custom_call.1} parent=1 // pred_check
      _
    $region11: #{tpu_custom_call.1} parent=1 // pred_check_branch
      %45 = sbr.rel (0) target = $region13
    $region12: #{tpu_custom_call.1} parent=1 // pred_region
      %47 = dma.done [#allocation5], 512
    $region13: #{tpu_custom_call.1} parent=1 // pred_fallthru
      _
    // Predicated region
    $region14: #{tpu_custom_call.1} parent=1 // pred_check
      _
    $region15: #{tpu_custom_call.1} parent=1 // pred_check_branch
      %49 = sbr.rel (0) target = $region17
    $region16: #{tpu_custom_call.1} parent=1 // pred_region
      %51 = dma.done [#allocation8], 512
    $region17: #{tpu_custom_call.1} parent=1 // pred_fallthru
      _
    %s52 = sadd.s32 0, 0
    %p53 = scmp.lt.s32.totalorder %s52, 0
    %s54 = scalar_select %p53, %s52, 0
    %s55 = smul.u32 4, %s54
    %s56 = sadd.s32 0, 0
    %p57 = scmp.lt.s32.totalorder %s56, 0
    %s58 = scalar_select %p57, %s56, 0
    %s59 = smul.u32 4, %s58
    %s60 = sadd.s32 0, 0
    %p61 = scmp.eq.s32.totalorder 0, 0
    // Predicated region
    $region18: #{tpu_custom_call.1} parent=1 // pred_check
      %p62 = pneg %p61
    $region19: #{tpu_custom_call.1} parent=1 // pred_check_branch
      %64 = sbr.rel (%p62) target = $region21
    $region20: #{tpu_custom_call.1} parent=1 // pred_region
      %65 = vst [vmem:[#allocation2] sm:$0xff] 0.0
      %66 = vst [vmem:[#allocation3] sm:$0xff] 0.0
    $region21: #{tpu_custom_call.1} parent=1 // pred_fallthru
      _
    %p67 = scmp.lt.s32.totalorder %s60, 1
    // Predicated region
    $region22: #{tpu_custom_call.1} parent=1 // pred_check
      %p68 = pneg %p67
    $region23: #{tpu_custom_call.1} parent=1 // pred_check_branch
      %70 = sbr.rel (%p68) target = $region25
    $region24: #{tpu_custom_call.1} parent=1 // pred_region
      %v71 = vld [vmem:[#allocation4] sm:$0xff]
      %v72 = vld [vmem:[#allocation7] sm:$0xff]
      %v73 = vmul.f32 %v71, %v72
      %v74 = vadd.f32 %v73, 0.0
      %v75 = vmul.f32 %v71, %v71
      %v76 = vadd.f32 %v75, 0.0
      %v77 = vmul.f32 %v72, %v72
      %v78 = vadd.f32 %v76, %v77
      %s79 = scalar_lea.vmem [#allocation4], 8
      %v80 = vld [vmem:[%s79] sm:$0xff]
      %s81 = scalar_lea.vmem [#allocation7], 8
      %v82 = vld [vmem:[%s81] sm:$0xff]
      %v83 = vmul.f32 %v80, %v82
      %v84 = vadd.f32 %v74, %v83
      %v85 = vmul.f32 %v80, %v80
      %v86 = vadd.f32 %v78, %v85
      %v87 = vmul.f32 %v82, %v82
      %v88 = vadd.f32 %v86, %v87
      %s89 = scalar_lea.vmem [#allocation4], 16
      %v90 = vld [vmem:[%s89] sm:$0xff]
      %s91 = scalar_lea.vmem [#allocation7], 16
      %v92 = vld [vmem:[%s91] sm:$0xff]
      %v93 = vmul.f32 %v90, %v92
      %v94 = vadd.f32 %v84, %v93
      %v95 = vmul.f32 %v90, %v90
      %v96 = vadd.f32 %v88, %v95
      %v97 = vmul.f32 %v92, %v92
      %v98 = vadd.f32 %v96, %v97
      %s99 = scalar_lea.vmem [#allocation4], 24
      %v100 = vld [vmem:[%s99] sm:$0xff]
      %s101 = scalar_lea.vmem [#allocation7], 24
      %v102 = vld [vmem:[%s101] sm:$0xff]
      %v103 = vmul.f32 %v100, %v102
      %v104 = vadd.f32 %v94, %v103
      %v105 = vmul.f32 %v100, %v100
      %v106 = vadd.f32 %v98, %v105
      %v107 = vmul.f32 %v102, %v102
      %v108 = vadd.f32 %v106, %v107
      %v109 = vld [vmem:[#allocation2] sm:$0xff]
      %v110 = vadd.f32 %v109, %v104
      %111 = vst [vmem:[#allocation2] sm:$0xff] %v110
      %v112 = vld [vmem:[#allocation3] sm:$0xff]
      %v113 = vadd.f32 %v112, %v108
      %114 = vst [vmem:[#allocation3] sm:$0xff] %v113
    $region25: #{tpu_custom_call.1} parent=1 // pred_fallthru
      _
    // Predicated region
    $region26: #{tpu_custom_call.1} parent=1 // pred_check
      %p115 = pneg %p61
    $region27: #{tpu_custom_call.1} parent=1 // pred_check_branch
      %117 = sbr.rel (%p115) target = $region29
    $region28: #{tpu_custom_call.1} parent=1 // pred_region
      %v118 = vld [vmem:[#allocation2] sm:$0xff]
      %119 = vadd.xlane.f32.xlu0 %v118
      %v120 = vpop.xlane.xlu0 %119
      %v121 = vld [vmem:[#allocation3] sm:$0xff]
      %122 = vadd.xlane.f32.xlu0 %v121
      %v123 = vpop.xlane.xlu0 %122
      %v124 = vlaneseq
      %v125 = vshrl.u32 %v124, 7
      %v126 = vlaneseq
      %v127 = vand.u32 %v126, 127
      %vm128 = vcmp.lt.s32.totalorder %v127, 4
      %vm129 = vcmp.lt.s32.totalorder %v125, 0
      %v130 = vsub.s32 0, %v125
      %v131 = vsel %vm129, %v130, %v125
      %v132 = vshrl.u32 %v131, 2
      %v133 = vand.u32 %v131, 3
      %v134 = vsub.s32 0, %v133
      %v135 = vsel %vm129, %v134, %v133
      %vm136 = vcmp.ne.s32.totalorder %v135, 0
      %vm137 = vcmp.lt.s32.totalorder %v135, 0
      %vm138 = vmand %vm137, %vm136
      %v139 = vadd.s32 %v135, 4
      %v140 = vsel %vm138, %v139, %v135
      %vm141 = vcmp.eq.s32.totalorder %v140, %v127
      %vm142 = vmand %vm128, %vm141
      %v143 = vsel %vm142, 1.0, 0.0
      %v144 = vmul.f32 %v143, %v120
      %v145 = vrot.slane %v144, 4
      %v146 = vadd.f32 %v144, %v145
      %v147 = vrot.slane %v146, 2
      %v148 = vadd.f32 %v146, %v147
      %v149 = vrot.slane %v148, 1
      %v150 = vadd.f32 %v148, %v149
      %v151 = vmul.f32 %v143, %v123
      %v152 = vrot.slane %v151, 4
      %v153 = vadd.f32 %v151, %v152
      %v154 = vrot.slane %v153, 2
      %v155 = vadd.f32 %v153, %v154
      %v156 = vrot.slane %v155, 1
      %v157 = vadd.f32 %v155, %v156
      %vm158 = vcmask 1040384
      %v159 = vsel %vm158, %v150, %v157
      %160 = vst [vmem:[#allocation9] sm:$0x3] %v159
    $region29: #{tpu_custom_call.1} parent=1 // pred_fallthru
      _
    // Predicated region
    $region30: #{tpu_custom_call.1} parent=1 // pred_check
      _
    $region31: #{tpu_custom_call.1} parent=1 // pred_check_branch
      %162 = sbr.rel (0) target = $region33
    $region32: #{tpu_custom_call.1} parent=1 // pred_region
      %164 = vsyncadd [#allocation6], 0
      %s166 = sshll.u32 [#allocation9], 4
      %s167 = int_to_ptr.vmem [resolvable:$true] %s166
      %s168 = sshll.u32 %s2, 4
      %s169 = int_to_ptr.hbm [resolvable:$true] %s168
      %171 = dma.vmem_to_hbm [thread:$0]  %s167, 32, %s169, [#allocation6]
    $region33: #{tpu_custom_call.1} parent=1 // pred_fallthru
      _
    // Predicated region
    $region34: #{tpu_custom_call.1} parent=1 // pred_check
      _
    $region35: #{tpu_custom_call.1} parent=1 // pred_check_branch
      %173 = sbr.rel (0) target = $region37
    $region36: #{tpu_custom_call.1} parent=1 // pred_region
      %175 = dma.done [#allocation6], 32
    $region37: #{tpu_custom_call.1} parent=1 // pred_fallthru
      _
    %176 = vsyncpa [#allocation5], 1
    %177 = vsyncpa [#allocation8], 1
    %178 = vsyncpa [#allocation6], 1

</llo_original>
